<compile_context>
chip_gen: v6e
topology: v6e:2x2x1
jax: 0.10.0
libtpu: 0.0.40
codegen_flags: <defaults>
</compile_context>

<pallas_src>
import jax
import jax.numpy as jnp
from jax.experimental import pallas as pl
from jax.experimental.pallas import tpu as pltpu


def _round_up(x, m):
    return (x + m - 1) // m * m


# ---------------------------------------------------------------------------
# Kernel 1: feature projection  fts = seq @ W^T   (computed once per node)
# ---------------------------------------------------------------------------
def _proj_kernel(seq_ref, w_ref, fts_ref):
    fts_ref[...] = jnp.dot(
        seq_ref[...].astype(jnp.bfloat16), w_ref[...],
        preferred_element_type=jnp.float32,
    ).astype(fts_ref.dtype)


# ---------------------------------------------------------------------------
# Kernel 2: graph aggregation + bias + PReLU
#   out[b, i] = PReLU( sum_k adj[b, i, k] @ fts[b, k] + bias )
# ---------------------------------------------------------------------------
def _aggregate_kernel(alpha_ref, adj_ref, fts_ref, b_ref, out_ref):
    k = pl.program_id(2)

    @pl.when(k == 0)
    def _():
        out_ref[...] = jnp.zeros_like(out_ref)

    # adj arrives f32 straight from HBM; cast the tile to bf16 on the VPU
    # (hidden under MXU time) instead of materializing a bf16 copy of the
    # O(N^2) adjacency in the wrapper.
    out_ref[...] += jnp.dot(
        adj_ref[...].astype(jnp.bfloat16), fts_ref[...],
        preferred_element_type=jnp.float32)

    @pl.when(k == pl.num_programs(2) - 1)
    def _():
        alpha = alpha_ref[0]
        out = out_ref[...] + b_ref[...]            # bias broadcast over nodes
        out_ref[...] = jnp.where(out > 0, out, alpha * out)


def gcn_forward(seq, adj, weight_t, bias, alpha):
    """seq: (B, N, F_in) f32, adj: (B, N, N) f32, weight_t: (F_in, F_out) f32,
    bias: (F_out,) f32, alpha: scalar PReLU slope. Returns (B, N, F_out) f32."""
    B, N, F_in = seq.shape
    F_out = weight_t.shape[1]

    Fi = _round_up(F_in, 128)
    Fo = _round_up(F_out, 128)
    Np = _round_up(N, 128)             # pad only to lane width, never tile_n

    # Largest MXU-friendly tile in {512, 256, 128} that divides Np.
    tile = next(t for t in (512, 256, 128) if Np % t == 0)
    tm = tk = tile
    # v7x: ensure >= 2 parallel (batch x row-tile) units for the 2 TensorCores.
    while B * (Np // tm) < 2 and tm > 128:
        tm //= 2

    # --- wrapper-side prep: pad only where strictly needed, adj stays f32 ---
    if (Np, Fi) != (N, F_in):
        seq = jnp.pad(seq, ((0, 0), (0, Np - N), (0, Fi - F_in)))
    if Np != N:
        adj = jnp.pad(adj, ((0, 0), (0, Np - N), (0, Np - N)))
    w_p = jnp.pad(weight_t, ((0, Fi - F_in), (0, Fo - F_out))).astype(jnp.bfloat16)
    b_p = jnp.pad(bias, (0, Fo - F_out)).reshape(1, Fo).astype(jnp.float32)
    alpha_arr = jnp.asarray(alpha, jnp.float32).reshape(1)

    # ---- pass 1: projection (once per node, not once per row tile) ---------
    proj_cost = pl.CostEstimate(
        flops=int(2.0 * B * Np * Fi * Fo), transcendentals=0,
        bytes_accessed=int(seq.size * 4 + w_p.size * 2 + B * Np * Fo * 2))
    fts = pl.pallas_call(
        _proj_kernel,
        out_shape=jax.ShapeDtypeStruct((B, Np, Fo), jnp.bfloat16),
        grid_spec=pltpu.PrefetchScalarGridSpec(
            num_scalar_prefetch=0,
            grid=(B, Np // tk),
            in_specs=[
                pl.BlockSpec((pl.Squeezed(), tk, Fi), lambda b, i: (b, i, 0)),
                pl.BlockSpec((Fi, Fo), lambda b, i: (0, 0)),   # resident W^T
            ],
            out_specs=pl.BlockSpec((pl.Squeezed(), tk, Fo),
                                   lambda b, i: (b, i, 0)),
        ),
        compiler_params=pltpu.CompilerParams(
            dimension_semantics=("parallel", "parallel")),
        cost_estimate=proj_cost,
    )(seq, w_p)

    # ---- pass 2: aggregation + bias + PReLU --------------------------------
    grid = (B, Np // tm, Np // tk)

    # Explicit VMEM budget (v7x has 64 MiB physical / 32 MiB scoped default).
    vmem_est = (3 * tm * tk * 4          # adj f32, Buffered(3)
                + 2 * tk * Fo * 2        # fts bf16, double buffered
                + 2 * tm * Fo * 4        # resident f32 output block
                + 2 * Fo * 4             # bias
                + (2 << 20))             # headroom for internal scratch
    vmem_limit = int(min(max(vmem_est, 16 << 20), 64 << 20))

    agg_cost = pl.CostEstimate(
        flops=int(2.0 * B * Np * Np * Fo), transcendentals=0,
        bytes_accessed=int(B * Np * Np * 4                    # adj f32, once
                           + B * Np * Fo * 2 * (Np // tm)     # fts re-reads
                           + B * Np * Fo * 4))                # output writeback

    out_p = pl.pallas_call(
        _aggregate_kernel,
        out_shape=jax.ShapeDtypeStruct((B, Np, Fo), jnp.float32),
        grid_spec=pltpu.PrefetchScalarGridSpec(
            num_scalar_prefetch=0,
            grid=grid,
            in_specs=[
                # PReLU alpha: scalar in SMEM.
                pl.BlockSpec(memory_space=pltpu.MemorySpace.SMEM),
                # adj tile (f32, cast in-kernel); deeper buffering on the
                # dominant HBM stream (biggest help on v5e).
                pl.BlockSpec((pl.Squeezed(), tm, tk),
                             lambda b, i, k: (b, i, k),
                             pipeline_mode=pl.Buffered(3)),
                # projected feature slab for this contraction step.
                pl.BlockSpec((pl.Squeezed(), tk, Fo), lambda b, i, k: (b, k, 0)),
                # bias: tiny, resident.
                pl.BlockSpec((1, Fo), lambda b, i, k: (0, 0)),
            ],
            # Block index constant along k -> stays VMEM-resident and doubles
            # as the f32 accumulator (no separate scratch, no final copy).
            out_specs=pl.BlockSpec((pl.Squeezed(), tm, Fo),
                                   lambda b, i, k: (b, i, 0)),
        ),
        compiler_params=pltpu.CompilerParams(
            dimension_semantics=("parallel", "parallel", "arbitrary"),
            vmem_limit_bytes=vmem_limit),
        cost_estimate=agg_cost,
    )(alpha_arr, adj, fts, b_p)

    # Slice off node / feature padding.
    return out_p[:, :N, :F_out]


if __name__ == "__main__":
    # Small shapes consistent with the module's forward.
    B, N, in_ft, out_ft = 2, 16, 32, 32

    key = jax.random.PRNGKey(0)
    k_seq, k_adj, k_w = jax.random.split(key, 3)

    seq = jax.random.normal(k_seq, (B, N, in_ft), dtype=jnp.float32)
    adj = jax.random.uniform(k_adj, (B, N, N), dtype=jnp.float32)

    # nn.Linear weight: xavier_uniform_ over (out_ft, in_ft); we store its
    # transpose (in_ft, out_ft) so the kernel does a plain seq @ W^T.
    bound = (6.0 / (in_ft + out_ft)) ** 0.5
    weight = jax.random.uniform(k_w, (out_ft, in_ft), dtype=jnp.float32,
                                minval=-bound, maxval=bound)
    weight_t = weight.T

    bias = jnp.zeros((out_ft,), dtype=jnp.float32)   # self.bias.data.fill_(0.0)
    alpha = 0.25                                     # nn.PReLU default init

    out = gcn_forward(seq, adj, weight_t, bias, alpha)
    jax.block_until_ready(out)

    # Reference check in plain JAX f32 (same math path as torch forward).
    # Kernel uses bf16 matmuls with f32 accumulation -> loosened tolerance.
    ref = jnp.einsum("bnm,bmf->bnf", adj, seq @ weight_t) + bias
    ref = jnp.where(ref > 0, ref, alpha * ref)
    assert out.shape == ref.shape
    assert jnp.allclose(out, ref, atol=5e-2, rtol=5e-2)

    print("KERNEL_OK")
</pallas_src>

<mosaic_0001>
module attributes {stable_mosaic.version = 11 : i64} {
  func.func @_proj_kernel(%arg0: i32, %arg1: i32, %arg2: memref<1x128x128xf32, #tpu.memory_space<vmem>>, %arg3: memref<128x128xbf16, #tpu.memory_space<vmem>>, %arg4: memref<1x128x128xbf16, #tpu.memory_space<vmem>>) attributes {dimension_semantics = [#tpu.dimension_semantics<parallel>, #tpu.dimension_semantics<parallel>], iteration_bounds = array<i64: 2, 1>, scalar_prefetch = 0 : i64, scratch_operands = 0 : i64, tpu.core_type = #tpu.core_type<tc>, window_params = [{transform_indices = @transform_0, window_bounds = array<i64: 1, 128, 128>}, {pipeline_mode = #tpu.pipeline_mode<synchronous>, transform_indices = @transform_1, window_bounds = array<i64: 128, 128>}, {transform_indices = @transform_2, window_bounds = array<i64: 1, 128, 128>}]} {
    %c0 = arith.constant 0 : index
    %c0_0 = arith.constant 0 : index
    %c0_1 = arith.constant 0 : index
    %0 = vector.load %arg2[%c0, %c0_0, %c0_1] : memref<1x128x128xf32, #tpu.memory_space<vmem>>, vector<1x128x128xf32>
    %1 = vector.shape_cast %0 : vector<1x128x128xf32> to vector<128x128xf32>
    %2 = arith.truncf %1 : vector<128x128xf32> to vector<128x128xbf16>
    %c0_2 = arith.constant 0 : index
    %c0_3 = arith.constant 0 : index
    %3 = vector.load %arg3[%c0_2, %c0_3] : memref<128x128xbf16, #tpu.memory_space<vmem>>, vector<128x128xbf16>
    %cst = arith.constant dense<0.000000e+00> : vector<128x128xf32>
    %4 = tpu.matmul %2, %3, %cst {dimension_numbers = #tpu.dot_dimension_numbers<[1], [0], [0], [1], [0, 0, 1, 1], [], []>} : vector<128x128xbf16>, vector<128x128xbf16>, vector<128x128xf32> -> vector<128x128xf32>
    %5 = arith.truncf %4 : vector<128x128xf32> to vector<128x128xbf16>
    %c0_4 = arith.constant 0 : index
    %c0_5 = arith.constant 0 : index
    %c0_6 = arith.constant 0 : index
    %6 = vector.load %arg4[%c0_4, %c0_5, %c0_6] : memref<1x128x128xbf16, #tpu.memory_space<vmem>>, vector<1x128x128xbf16>
    %7 = vector.shape_cast %6 : vector<1x128x128xbf16> to vector<128x128xbf16>
    %8 = vector.shape_cast %5 : vector<128x128xbf16> to vector<1x128x128xbf16>
    tpu.vector_store %arg4[%c0_4, %c0_5, %c0_6], %8 {strides = array<i32>} : memref<1x128x128xbf16, #tpu.memory_space<vmem>>, vector<1x128x128xbf16>,
    return
  }
  func.func @transform_0(%arg0: i32, %arg1: i32) -> (i32, i32, i32) {
    %c0_i32 = arith.constant 0 : i32
    %c0_i32_0 = arith.constant 0 : i32
    return %arg0, %arg1, %c0_i32 : i32, i32, i32
  }
  func.func @transform_1(%arg0: i32, %arg1: i32) -> (i32, i32) {
    %c0_i32 = arith.constant 0 : i32
    %c0_i32_0 = arith.constant 0 : i32
    %c0_i32_1 = arith.constant 0 : i32
    return %c0_i32, %c0_i32_0 : i32, i32
  }
  func.func @transform_2(%arg0: i32, %arg1: i32) -> (i32, i32, i32) {
    %c0_i32 = arith.constant 0 : i32
    %c0_i32_0 = arith.constant 0 : i32
    return %arg0, %arg1, %c0_i32 : i32, i32, i32
  }
}

</mosaic_0001>

<llo_original>
// kernel: tpu_custom_call.1
$region0: #{tpu_custom_call.1}
  #allocation0 [shape = 'u32[]', space=smem, size = 0x4, offset = 0x4, fixed_abs, tag = 'smem constant byte address 0x4 - core index']
  #allocation1 [shape = 'u32[144,128]{1,0:T(1,128)}', space=vmem, size = 0x12000, scoped, tag = 'internal scratch']
  %s0 = inlined_call_operand.hbm [shape: f32[2,128,128], index: 0, kind: input, shape index: {}]
  %s1 = inlined_call_operand.hbm [shape: bf16[128,128], index: 1, kind: input, shape index: {}]
  %s2 = inlined_call_operand.hbm [shape: bf16[2,128,128], index: 2, kind: output, shape index: {}]
  %s3 = sld [smem:[#allocation0]]
  $region49: #{tpu_custom_call.1} parent=0
    _
  %s5 = ssub.s32 1, %s3
  %s6 = scalar_select 0, %s5, %s3
  $region1: #{tpu_custom_call.1} parent=0
    #allocation2 [shape = 'u8[131072]{0}', space=vmem, size = 0x20000, scoped, tag = 'input window, operand 0']
    #allocation3 [shape = 's32[2]{0}', space=sflag, size = 0x8, scoped, tag = 'scoped memory for tpu_custom_call.1']
    #allocation4 [shape = 's32[2]{0}', space=sflag, size = 0x8, scoped, tag = 'scoped memory for tpu_custom_call.1']
    #allocation5 [shape = 'u8[32768]{0}', space=vmem, size = 0x8000, scoped, tag = 'input window, operand 1, single buffered']
    #allocation6 [shape = 's32[1]{0}', space=sflag, size = 0x4, scoped, tag = 'scoped memory for tpu_custom_call.1']
    #allocation7 [shape = 'u8[65536]{0}', space=vmem, size = 0x10000, scoped, tag = 'output window, operand 0']
    %7 = vsyncpa [#allocation3], 0
    %s8 = scalar_lea.sflag [#allocation3], 1
    %9 = vsyncpa %s8, 0
    %10 = vsyncpa [#allocation6], 0
    %11 = vsyncpa [#allocation4], 0
    %s12 = scalar_lea.sflag [#allocation4], 1
    %13 = vsyncpa %s12, 0
    loop: start=0, step=1, limit=4
    $region2: #{tpu_custom_call.1} parent=1 // loop_pre_header
      _
    $region3: #{tpu_custom_call.1} parent=1 // loop_header
      %s15 = sphi 0, %s19
      %p16 = scmp.ge.s32.totalorder %s15, 4
      %s22 = sphi 0, %s34
      %s23 = sphi 0, %s30
      %s24 = sphi 0, %s22
      %s25 = sphi 0, %s23
      %s26 = sphi 0, %s24
      %s27 = sphi 0, %s25
      %s39 = sphi 0, %s41
      %s42 = sphi 0, %s39
      %s43 = sphi 0, %s42
      %s59 = sphi 0, %s43
      %s63 = sphi 0, %s63
      %s65 = sphi 0, %s63
      %s66 = sphi 0, %s65
      %s80 = sphi 0, %s66
      %s88 = sphi 0, %s90
      %s91 = sphi 0, %s88
      %s92 = sphi 0, %s91
      %s108 = sphi 0, %s92
    $region4: #{tpu_custom_call.1} parent=1 // loop_header_branch
      %18 = sbr.rel (%p16) target = $region8
    $region5: #{tpu_custom_call.1} parent=1 // loop_body
      %s20 = ssub.s32 %s15, 1
      %s21 = ssub.s32 %s15, 2
      %s28 = sadd.s32 1, %s23
      %p29 = scmp.ge.s32.totalorder %s28, 1
      %s30 = scalar_select %p29, 0, %s28
      %s31 = sadd.s32 1, %s22
      %s32 = scalar_select %p29, %s31, %s22
      %p33 = scmp.ge.s32.totalorder %s32, 2
      %s34 = scalar_select %p33, 0, %s32
      %s35 = ssub.s32 %s22, %s34
      %s36 = ssub.s32 %s23, %s30
      %s37 = sor.u32 %s35, %s36
      %p38 = scmp.eq.s32.totalorder %s37, 0
      %s40 = sadd.s32 %s39, 1
      %s41 = scalar_select %p38, %s39, %s40
      %p44 = pneg %p38
      %p45 = scmp.eq.s32.totalorder %s15, 1
      %p46 = por %p44, %p45
      %p47 = scmp.ne.s32.totalorder %s39, %s42
      %p48 = scmp.eq.s32.totalorder %s15, 0
      %p49 = por %p47, %p48
      %p50 = scmp.ne.s32.totalorder %s39, %s42
      %p51 = scmp.eq.s32.totalorder %s20, 1
      %p52 = por %p50, %p51
      %p53 = scmp.ne.s32.totalorder %s42, %s43
      %p54 = scmp.eq.s32.totalorder %s20, 0
      %p55 = por %p53, %p54
      %p56 = scmp.ne.s32.totalorder %s42, %s43
      %p57 = scmp.eq.s32.totalorder %s21, 1
      %p58 = por %p56, %p57
      %p60 = scmp.ne.s32.totalorder %s43, %s59
      %p61 = scmp.eq.s32.totalorder %s21, 0
      %p62 = por %p60, %p61
      %s64 = sadd.s32 %s63, 1
      %p67 = scmp.eq.s32.totalorder %s15, 1
      %p68 = scmp.ne.s32.totalorder %s63, %s65
      %p69 = scmp.eq.s32.totalorder %s15, 0
      %p70 = por %p68, %p69
      %p71 = scmp.ne.s32.totalorder %s63, %s65
      %p72 = scmp.eq.s32.totalorder %s20, 1
      %p73 = por %p71, %p72
      %p74 = scmp.ne.s32.totalorder %s65, %s66
      %p75 = scmp.eq.s32.totalorder %s20, 0
      %p76 = por %p74, %p75
      %p77 = scmp.ne.s32.totalorder %s65, %s66
      %p78 = scmp.eq.s32.totalorder %s21, 1
      %p79 = por %p77, %p78
      %p81 = scmp.ne.s32.totalorder %s66, %s80
      %p82 = scmp.eq.s32.totalorder %s21, 0
      %p83 = por %p81, %p82
      %s84 = ssub.s32 %s22, %s34
      %s85 = ssub.s32 %s23, %s30
      %s86 = sor.u32 %s84, %s85
      %p87 = scmp.eq.s32.totalorder %s86, 0
      %s89 = sadd.s32 %s88, 1
      %s90 = scalar_select %p87, %s88, %s89
      %p93 = pneg %p87
      %p94 = scmp.eq.s32.totalorder %s15, 1
      %p95 = por %p93, %p94
      %p96 = scmp.ne.s32.totalorder %s88, %s91
      %p97 = scmp.eq.s32.totalorder %s15, 0
      %p98 = por %p96, %p97
      %p99 = scmp.ne.s32.totalorder %s88, %s91
      %p100 = scmp.eq.s32.totalorder %s20, 1
      %p101 = por %p99, %p100
      %p102 = scmp.ne.s32.totalorder %s91, %s92
      %p103 = scmp.eq.s32.totalorder %s20, 0
      %p104 = por %p102, %p103
      %p105 = scmp.ne.s32.totalorder %s91, %s92
      %p106 = scmp.eq.s32.totalorder %s21, 1
      %p107 = por %p105, %p106
      %p109 = scmp.ne.s32.totalorder %s92, %s108
      %p110 = scmp.eq.s32.totalorder %s21, 0
      %p111 = por %p109, %p110
      %p112 = scmp.le.s32.totalorder 1, %s15
      %p113 = scmp.lt.s32.totalorder %s15, 3
      %p114 = pnand %p112, %p113
      %p115 = pneg %p114
      // Predicated region
      $region9: #{tpu_custom_call.1} parent=5 // pred_check
        _
      $region10: #{tpu_custom_call.1} parent=5 // pred_check_branch
        %117 = sbr.rel (%p114) target = $region12
      $region11: #{tpu_custom_call.1} parent=5 // pred_region
        %s118 = ssub.s32 %s15, 1
        // Predicated region
        $region13: #{tpu_custom_call.1} parent=11 // pred_check
          %p119 = pneg %p76
        $region14: #{tpu_custom_call.1} parent=11 // pred_check_branch
          %121 = sbr.rel (%p119) target = $region16
        $region15: #{tpu_custom_call.1} parent=11 // pred_region
          %s123 = ssub.s32 1024, 1024
          %124 = vsyncadd [#allocation6], %s123
          %s125 = sshll.u32 [#allocation5], 4
          %s126 = int_to_ptr.vmem [resolvable:$true] %s125
          %131 = dma.hbm_to_vmem [thread:$0]  %s1, 1024, %s126, [#allocation6], 64, 64, 4
        $region16: #{tpu_custom_call.1} parent=11 // pred_fallthru
          _
      $region12: #{tpu_custom_call.1} parent=5 // pred_fallthru
        _
      %p132 = scmp.lt.s32.totalorder %s15, 2
      // Predicated region
      $region17: #{tpu_custom_call.1} parent=5 // pred_check
        %p133 = pneg %p132
      $region18: #{tpu_custom_call.1} parent=5 // pred_check_branch
        %135 = sbr.rel (%p133) target = $region20
      $region19: #{tpu_custom_call.1} parent=5 // pred_region
        // Predicated region
        $region21: #{tpu_custom_call.1} parent=19 // pred_check
          %p136 = pneg %p49
        $region22: #{tpu_custom_call.1} parent=19 // pred_check_branch
          %138 = sbr.rel (%p136) target = $region24
        $region23: #{tpu_custom_call.1} parent=19 // pred_region
          %s139 = sand.u32 %s39, 1
          %s140 = scalar_lea.sflag [#allocation3], %s139
          %s141 = sand.u32 %s39, 1
          %s142 = smul.addr %s141, 128
          %s143 = scalar_lea.vmem [#allocation2], %s142
          %s144 = smul.u32 16, %s23
          %s146 = ssub.s32 2048, 2048
          %147 = vsyncadd %s140, %s146
          %s148 = smul.addr %s22, 16
          %s149 = sadd.s32 %s144, %s148
          %s150 = smul.addr %s149, 128
          %s151 = scalar_lea.hbm %s0, %s150
          %s152 = sshll.u32 %s143, 4
          %s153 = int_to_ptr.vmem [resolvable:$true] %s152
          %158 = dma.hbm_to_vmem [thread:$0]  %s151, 2048, %s153, %s140, 128, 128, 8
        $region24: #{tpu_custom_call.1} parent=19 // pred_fallthru
          _
      $region20: #{tpu_custom_call.1} parent=5 // pred_fallthru
        _
      %p159 = scmp.le.s32.totalorder 1, %s15
      %p160 = scmp.lt.s32.totalorder %s15, 3
      %p161 = pnand %p159, %p160
      %p162 = pneg %p161
      // Predicated region
      $region25: #{tpu_custom_call.1} parent=5 // pred_check
        _
      $region26: #{tpu_custom_call.1} parent=5 // pred_check_branch
        %164 = sbr.rel (%p161) target = $region28
      $region27: #{tpu_custom_call.1} parent=5 // pred_region
        %s165 = ssub.s32 %s15, 1
        %s166 = sand.u32 %s42, 1
        %s167 = scalar_lea.sflag [#allocation3], %s166
        %s168 = sand.u32 %s42, 1
        %s169 = smul.addr %s168, 128
        %s170 = scalar_lea.vmem [#allocation2], %s169
        // Predicated region
        $region29: #{tpu_custom_call.1} parent=27 // pred_check
          %p171 = pneg %p55
        $region30: #{tpu_custom_call.1} parent=27 // pred_check_branch
          %173 = sbr.rel (%p171) target = $region32
        $region31: #{tpu_custom_call.1} parent=27 // pred_region
          %174 = dma.done %s167, 2048
        $region32: #{tpu_custom_call.1} parent=27 // pred_fallthru
          _
        // Predicated region
        $region33: #{tpu_custom_call.1} parent=27 // pred_check
          %p175 = pneg %p76
        $region34: #{tpu_custom_call.1} parent=27 // pred_check_branch
          %177 = sbr.rel (%p175) target = $region36
        $region35: #{tpu_custom_call.1} parent=27 // pred_region
          %178 = dma.done [#allocation6], 1024
        $region36: #{tpu_custom_call.1} parent=27 // pred_fallthru
          _
        %s179 = sand.u32 %s42, 1
        %s180 = scalar_lea.sflag [#allocation3], %s179
        %s181 = sand.u32 %s42, 1
        %s182 = smul.addr %s181, 128
        %s183 = scalar_lea.vmem [#allocation2], %s182
        %p184 = pneg %p55
        %p185 = pneg %p52
        %p186 = pneg %p76
        %p187 = pneg %p73
        %p188 = pneg %p104
        %p189 = pneg %p101
        %s190 = sand.u32 %s91, 1
        %s191 = scalar_lea.sflag [#allocation4], %s190
        %s192 = sand.u32 %s91, 1
        %s193 = smul.addr %s192, 64
        %s194 = scalar_lea.vmem [#allocation7], %s193
        %s195 = smul.u32 16, %s25
        %s196 = smul.u32 16, %s25
        %v198 = vld [vmem:[%s170] sm:$0xff]
        %v199 = vld [vmem:[%s170 + $0x8] sm:$0xff]
        %v200 = vld [vmem:[%s170 + $0x10] sm:$0xff]
        %v201 = vld [vmem:[%s170 + $0x18] sm:$0xff]
        %v202 = vld [vmem:[%s170 + $0x20] sm:$0xff]
        %v203 = vld [vmem:[%s170 + $0x28] sm:$0xff]
        %v204 = vld [vmem:[%s170 + $0x30] sm:$0xff]
        %v205 = vld [vmem:[%s170 + $0x38] sm:$0xff]
        %v206 = vld [vmem:[%s170 + $0x40] sm:$0xff]
        %v207 = vld [vmem:[%s170 + $0x48] sm:$0xff]
        %v208 = vld [vmem:[%s170 + $0x50] sm:$0xff]
        %v209 = vld [vmem:[%s170 + $0x58] sm:$0xff]
        %v210 = vld [vmem:[%s170 + $0x60] sm:$0xff]
        %v211 = vld [vmem:[%s170 + $0x68] sm:$0xff]
        %v212 = vld [vmem:[%s170 + $0x70] sm:$0xff]
        %v213 = vld [vmem:[%s170 + $0x78] sm:$0xff]
        %v214 = vpack.c.bf16 %v199, %v198
        %v215 = vpack.c.bf16 %v201, %v200
        %v216 = vpack.c.bf16 %v203, %v202
        %v217 = vpack.c.bf16 %v205, %v204
        %v218 = vpack.c.bf16 %v207, %v206
        %v219 = vpack.c.bf16 %v209, %v208
        %v220 = vpack.c.bf16 %v211, %v210
        %v221 = vpack.c.bf16 %v213, %v212
        %v222 = vld [vmem:[#allocation5] sm:$0xf]
        %v223 = vld [vmem:[#allocation5 + $0x4] sm:$0xf]
        %v224 = vld [vmem:[#allocation5 + $0x8] sm:$0xf]
        %v225 = vld [vmem:[#allocation5 + $0xc] sm:$0xf]
        %v226 = vld [vmem:[#allocation5 + $0x10] sm:$0xf]
        %v227 = vld [vmem:[#allocation5 + $0x14] sm:$0xf]
        %v228 = vld [vmem:[#allocation5 + $0x18] sm:$0xf]
        %v229 = vld [vmem:[#allocation5 + $0x1c] sm:$0xf]
        %v230 = vld [vmem:[#allocation5 + $0x20] sm:$0xf]
        %v231 = vld [vmem:[#allocation5 + $0x24] sm:$0xf]
        %v232 = vld [vmem:[#allocation5 + $0x28] sm:$0xf]
        %v233 = vld [vmem:[#allocation5 + $0x2c] sm:$0xf]
        %v234 = vld [vmem:[#allocation5 + $0x30] sm:$0xf]
        %v235 = vld [vmem:[#allocation5 + $0x34] sm:$0xf]
        %v236 = vld [vmem:[#allocation5 + $0x38] sm:$0xf]
        %v237 = vld [vmem:[#allocation5 + $0x3c] sm:$0xf]
        %v254 = vunpack.c.l.b16 %v222
        %v255 = vunpack.c.l.b16 %v223
        %v256 = vunpack.c.l.b16 %v224
        %v257 = vunpack.c.l.b16 %v225
        %v258 = vunpack.c.l.b16 %v226
        %v259 = vunpack.c.l.b16 %v227
        %v260 = vunpack.c.l.b16 %v228
        %v261 = vunpack.c.l.b16 %v229
        %v262 = vunpack.c.l.b16 %v230
        %v263 = vunpack.c.l.b16 %v231
        %v264 = vunpack.c.l.b16 %v232
        %v265 = vunpack.c.l.b16 %v233
        %v266 = vunpack.c.l.b16 %v234
        %v267 = vunpack.c.l.b16 %v235
        %v268 = vunpack.c.l.b16 %v236
        %v269 = vunpack.c.l.b16 %v237
        %v270 = vpack.c.b16 %v255, %v254
        %v271 = vpack.c.b16 %v257, %v256
        %v272 = vpack.c.b16 %v259, %v258
        %v273 = vpack.c.b16 %v261, %v260
        %v274 = vpack.c.b16 %v263, %v262
        %v275 = vpack.c.b16 %v265, %v264
        %v276 = vpack.c.b16 %v267, %v266
        %v277 = vpack.c.b16 %v269, %v268
        %286 = vmatprep.subr.bf16.mxu0 0
        %287 = vmatpush1.bf16.msra.mxu0 %v277
        %288 = vmatprep.subr.bf16.mxu0 0
        %289 = vmatpush1.bf16.msra.mxu0 %v276
        %290 = vmatprep.subr.bf16.mxu0 0
        %291 = vmatpush1.bf16.msra.mxu0 %v275
        %292 = vmatprep.subr.bf16.mxu0 0
        %293 = vmatpush1.bf16.msra.mxu0 %v274
        %294 = vmatprep.subr.bf16.mxu0 0
        %295 = vmatpush1.bf16.msra.mxu0 %v273
        %296 = vmatprep.subr.bf16.mxu0 0
        %297 = vmatpush1.bf16.msra.mxu0 %v272
        %298 = vmatprep.subr.bf16.mxu0 0
        %299 = vmatpush1.bf16.msra.mxu0 %v271
        %300 = vmatprep.subr.bf16.mxu0 0
        %301 = vmatpush1.bf16.msra.mxu0 %v270
        %302 = vmatprep.subr.bf16.mxu0 0
        %303 = vmatpush2.bf16.msra.mxu0 0
        %304 = vmatprep.subr.bf16.mxu0 0
        %305 = vmatpush2.bf16.msra.mxu0 0
        %306 = vmatprep.subr.bf16.mxu0 0
        %307 = vmatpush2.bf16.msra.mxu0 0
        %308 = vmatprep.subr.bf16.mxu0 0
        %309 = vmatpush2.bf16.msra.mxu0 0
        %310 = vmatprep.subr.bf16.mxu0 0
        %311 = vmatpush2.bf16.msra.mxu0 0
        %312 = vmatprep.subr.bf16.mxu0 0
        %313 = vmatpush2.bf16.msra.mxu0 0
        %314 = vmatprep.subr.bf16.mxu0 0
        %315 = vmatpush2.bf16.msra.mxu0 0
        %316 = vmatprep.subr.bf16.mxu0 0
        %317 = vmatpush2.bf16.msra.mxu0 0
        %318 = vmatprep.mubr.bf16.mxu0 0
        %319 = vmatmul.mubr.bf16.gmra.mxu0 %v214
        %v320 = vpop.f32.mrf.mxu0
        %v321 = vadd.f32 0.0, %v320
        %v322 = vpop.f32.mrf.mxu0
        %v323 = vpop.f32.mrf.mxu0
        %v324 = vadd.f32 0.0, %v323
        %v325 = vpop.f32.mrf.mxu0
        %326 = vmatprep.mubr.bf16.mxu0 0
        %327 = vmatmul.mubr.bf16.gmra.mxu0 %v215
        %v328 = vpop.f32.mrf.mxu0
        %v329 = vadd.f32 0.0, %v328
        %v330 = vpop.f32.mrf.mxu0
        %v331 = vpop.f32.mrf.mxu0
        %v332 = vadd.f32 0.0, %v331
        %v333 = vpop.f32.mrf.mxu0
        %334 = vmatprep.mubr.bf16.mxu0 0
        %335 = vmatmul.mubr.bf16.gmra.mxu0 %v216
        %v336 = vpop.f32.mrf.mxu0
        %v337 = vadd.f32 0.0, %v336
        %v338 = vpop.f32.mrf.mxu0
        %v339 = vpop.f32.mrf.mxu0
        %v340 = vadd.f32 0.0, %v339
        %v341 = vpop.f32.mrf.mxu0
        %342 = vmatprep.mubr.bf16.mxu0 0
        %343 = vmatmul.mubr.bf16.gmra.mxu0 %v217
        %v344 = vpop.f32.mrf.mxu0
        %v345 = vadd.f32 0.0, %v344
        %v346 = vpop.f32.mrf.mxu0
        %v347 = vpop.f32.mrf.mxu0
        %v348 = vadd.f32 0.0, %v347
        %v349 = vpop.f32.mrf.mxu0
        %350 = vmatprep.mubr.bf16.mxu0 0
        %351 = vmatmul.mubr.bf16.gmra.mxu0 %v218
        %v352 = vpop.f32.mrf.mxu0
        %v353 = vadd.f32 0.0, %v352
        %v354 = vpop.f32.mrf.mxu0
        %v355 = vpop.f32.mrf.mxu0
        %v356 = vadd.f32 0.0, %v355
        %v357 = vpop.f32.mrf.mxu0
        %358 = vmatprep.mubr.bf16.mxu0 0
        %359 = vmatmul.mubr.bf16.gmra.mxu0 %v219
        %v360 = vpop.f32.mrf.mxu0
        %v361 = vadd.f32 0.0, %v360
        %v362 = vpop.f32.mrf.mxu0
        %v363 = vpop.f32.mrf.mxu0
        %v364 = vadd.f32 0.0, %v363
        %v365 = vpop.f32.mrf.mxu0
        %366 = vmatprep.mubr.bf16.mxu0 0
        %367 = vmatmul.mubr.bf16.gmra.mxu0 %v220
        %v368 = vpop.f32.mrf.mxu0
        %v369 = vadd.f32 0.0, %v368
        %v370 = vpop.f32.mrf.mxu0
        %v371 = vpop.f32.mrf.mxu0
        %v372 = vadd.f32 0.0, %v371
        %v373 = vpop.f32.mrf.mxu0
        %374 = vmatprep.mubr.bf16.mxu0 0
        %375 = vmatmul.mubr.bf16.gmra.mxu0 %v221
        %v376 = vpop.f32.mrf.mxu0
        %v377 = vadd.f32 0.0, %v376
        %v378 = vpop.f32.mrf.mxu0
        %v379 = vpop.f32.mrf.mxu0
        %v380 = vadd.f32 0.0, %v379
        %v381 = vpop.f32.mrf.mxu0
        %382 = vdwg.mxu0
        %v383 = vpack.c.bf16 %v324, %v321
        %v384 = vpack.c.bf16 %v332, %v329
        %v385 = vpack.c.bf16 %v340, %v337
        %v386 = vpack.c.bf16 %v348, %v345
        %v387 = vpack.c.bf16 %v356, %v353
        %v388 = vpack.c.bf16 %v364, %v361
        %v389 = vpack.c.bf16 %v372, %v369
        %v390 = vpack.c.bf16 %v380, %v377
        %v399 = vunpack.c.l.b16 %v383
        %v400 = vunpack.c.h.b16 %v383
        %v401 = vunpack.c.l.b16 %v384
        %v402 = vunpack.c.h.b16 %v384
        %v403 = vunpack.c.l.b16 %v385
        %v404 = vunpack.c.h.b16 %v385
        %v405 = vunpack.c.l.b16 %v386
        %v406 = vunpack.c.h.b16 %v386
        %v407 = vunpack.c.l.b16 %v387
        %v408 = vunpack.c.h.b16 %v387
        %v409 = vunpack.c.l.b16 %v388
        %v410 = vunpack.c.h.b16 %v388
        %v411 = vunpack.c.l.b16 %v389
        %v412 = vunpack.c.h.b16 %v389
        %v413 = vunpack.c.l.b16 %v390
        %v414 = vunpack.c.h.b16 %v390
        %v415 = vpack.c.b16 %v399, %v399
        %v416 = vpack.c.b16 %v400, %v400
        %v417 = vpack.c.b16 %v401, %v401
        %v418 = vpack.c.b16 %v402, %v402
        %v419 = vpack.c.b16 %v403, %v403
        %v420 = vpack.c.b16 %v404, %v404
        %v421 = vpack.c.b16 %v405, %v405
        %v422 = vpack.c.b16 %v406, %v406
        %v423 = vpack.c.b16 %v407, %v407
        %v424 = vpack.c.b16 %v408, %v408
        %v425 = vpack.c.b16 %v409, %v409
        %v426 = vpack.c.b16 %v410, %v410
        %v427 = vpack.c.b16 %v411, %v411
        %v428 = vpack.c.b16 %v412, %v412
        %v429 = vpack.c.b16 %v413, %v413
        %v430 = vpack.c.b16 %v414, %v414
        %447 = vst [vmem:[%s194] sm:$0xf] %v415
        %448 = vst [vmem:[%s194 + $0x4] sm:$0xf] %v416
        %449 = vst [vmem:[%s194 + $0x8] sm:$0xf] %v417
        %450 = vst [vmem:[%s194 + $0xc] sm:$0xf] %v418
        %451 = vst [vmem:[%s194 + $0x10] sm:$0xf] %v419
        %452 = vst [vmem:[%s194 + $0x14] sm:$0xf] %v420
        %453 = vst [vmem:[%s194 + $0x18] sm:$0xf] %v421
        %454 = vst [vmem:[%s194 + $0x1c] sm:$0xf] %v422
        %455 = vst [vmem:[%s194 + $0x20] sm:$0xf] %v423
        %456 = vst [vmem:[%s194 + $0x24] sm:$0xf] %v424
        %457 = vst [vmem:[%s194 + $0x28] sm:$0xf] %v425
        %458 = vst [vmem:[%s194 + $0x2c] sm:$0xf] %v426
        %459 = vst [vmem:[%s194 + $0x30] sm:$0xf] %v427
        %460 = vst [vmem:[%s194 + $0x34] sm:$0xf] %v428
        %461 = vst [vmem:[%s194 + $0x38] sm:$0xf] %v429
        %462 = vst [vmem:[%s194 + $0x3c] sm:$0xf] %v430
        %s463 = sand.u32 %s91, 1
        %s464 = scalar_lea.sflag [#allocation4], %s463
        %s465 = sand.u32 %s91, 1
        %s466 = smul.addr %s465, 64
        %s467 = scalar_lea.vmem [#allocation7], %s466
        // Predicated region
        $region37: #{tpu_custom_call.1} parent=27 // pred_check
          %p468 = pneg %p101
        $region38: #{tpu_custom_call.1} parent=27 // pred_check_branch
          %470 = sbr.rel (%p468) target = $region40
        $region39: #{tpu_custom_call.1} parent=27 // pred_region
          %s471 = smul.u32 16, %s25
          %s473 = ssub.s32 1024, 1024
          %474 = vsyncadd %s464, %s473
          %s475 = smul.addr %s24, 16
          %s476 = sadd.s32 %s471, %s475
          %s477 = smul.addr %s476, 64
          %s478 = scalar_lea.hbm %s2, %s477
          %s479 = sshll.u32 %s467, 4
          %s480 = int_to_ptr.vmem [resolvable:$true] %s479
          %485 = dma.vmem_to_hbm [thread:$0]  %s480, 1024, %s478, %s464, 64, 64, 4
        $region40: #{tpu_custom_call.1} parent=27 // pred_fallthru
          _
      $region28: #{tpu_custom_call.1} parent=5 // pred_fallthru
        _
      %p486 = scmp.le.s32.totalorder 2, %s15
      // Predicated region
      $region41: #{tpu_custom_call.1} parent=5 // pred_check
        %p487 = pneg %p486
      $region42: #{tpu_custom_call.1} parent=5 // pred_check_branch
        %489 = sbr.rel (%p487) target = $region44
      $region43: #{tpu_custom_call.1} parent=5 // pred_region
        %s490 = ssub.s32 %s15, 2
        // Predicated region
        $region45: #{tpu_custom_call.1} parent=43 // pred_check
          %p491 = pneg %p107
        $region46: #{tpu_custom_call.1} parent=43 // pred_check_branch
          %493 = sbr.rel (%p491) target = $region48
        $region47: #{tpu_custom_call.1} parent=43 // pred_region
          %s494 = sand.u32 %s92, 1
          %s495 = scalar_lea.sflag [#allocation4], %s494
          %s496 = sand.u32 %s92, 1
          %s497 = smul.addr %s496, 64
          %s498 = scalar_lea.vmem [#allocation7], %s497
          %499 = dma.done %s495, 1024
        $region48: #{tpu_custom_call.1} parent=43 // pred_fallthru
          _
      $region44: #{tpu_custom_call.1} parent=5 // pred_fallthru
        _
    $region6: #{tpu_custom_call.1} parent=1 // loop_footer
      %s19 = sadd.s32 1, %s15
    $region7: #{tpu_custom_call.1} parent=1 // loop_footer_branch
      %14 = sbr.rel target = $region3
    $region8: #{tpu_custom_call.1} parent=1 // loop_exit
      _
    %500 = vsyncpa [#allocation3], 1
    %s501 = scalar_lea.sflag [#allocation3], 1
    %502 = vsyncpa %s501, 1
    %503 = vsyncpa [#allocation6], 1
    %504 = vsyncpa [#allocation4], 1
    %s505 = scalar_lea.sflag [#allocation4], 1
    %506 = vsyncpa %s505, 1

</llo_original>
